<compile_context>
chip_gen: v7x
topology: tpu7x:2x2x1
jax: 0.10.0
libtpu: 0.0.40
codegen_flags: <defaults>
</compile_context>

<pallas_src>
import math
from functools import partial

import jax
import jax.numpy as jnp
from jax.experimental import pallas as pl
from jax.experimental.pallas import tpu as pltpu

LANE = 128


# ----------------------------- Pallas kernel --------------------------------
def mlp_kernel(x_ref, w01_ref, b01_ref, w2_ref, b2_ref, w3_ref, b3_ref, o_ref):
    # Folded (Linear0 -> Linear1) followed by ReLU.  [h, in] @ [in, Bt] -> [h, Bt]
    h = jnp.dot(w01_ref[...], x_ref[...], preferred_element_type=jnp.float32)
    h = jnp.maximum(h + b01_ref[...], 0.0)

    # Hidden layer 2: Linear(h, h) + ReLU.  f32 operands, f32 accumulation.
    h2 = jnp.dot(w2_ref[...], h, preferred_element_type=jnp.float32)
    h2 = jnp.maximum(h2 + b2_ref[...], 0.0)

    # Output head (out_features = 1): VPU multiply + sublane reduce instead of
    # an M=1, K=32 MXU pass (saves a full MXU fill/drain on a latency-bound kernel).
    y = jnp.sum(w3_ref[...] * h2, axis=0, keepdims=True)        # [1, Bt]
    o_ref[...] = y + b3_ref[0]                                  # scalar bias from SMEM


# ------------------------------- wrapper -------------------------------------
@partial(jax.jit, static_argnames=("batch_tile",))
def stacking_ensemble_forward(x, params, *, batch_tile=512):
    """x: [B, input_size] f32.  params: PyTorch-layout (W[out,in], b[out,1]) tuples."""
    B, input_size = x.shape
    (w0, b0), (w1, b1), (w2, b2), (w3, b3) = params
    hidden = w0.shape[0]

    # Fold the activation-free first Linear into the second (exact in f32).
    w01 = w1 @ w0                      # [hidden, input_size]
    b01 = w1 @ b0 + b1                 # [hidden, 1]

    # Batch-on-lanes layout; pad batch up to a lane-aligned multiple of the tile.
    Bp = max(LANE, pl.cdiv(B, LANE) * LANE)
    tile = max(LANE, (min(batch_tile, Bp) // LANE) * LANE)
    Bp = pl.cdiv(Bp, tile) * tile
    xt = x.T                           # [input_size, B]  (fused into the jit program)
    if Bp != B:
        xt = jnp.pad(xt, ((0, 0), (0, Bp - B)))

    w3t = w3.T                         # [hidden, 1] column for the VPU head
    b3s = b3.reshape((1,))             # scalar bias -> SMEM

    grid = (Bp // tile,)
    full = lambda i: (0, 0)
    bmap = lambda i: (0, i)

    cost = pl.CostEstimate(
        flops=int(2 * Bp * (input_size * hidden + hidden * hidden + hidden)),
        transcendentals=0,
        bytes_accessed=int(4 * (Bp * input_size + Bp + w01.size + w2.size
                                + w3.size + b01.size + b2.size + 1)),
    )

    out_t = pl.pallas_call(
        mlp_kernel,
        out_shape=jax.ShapeDtypeStruct((1, Bp), jnp.float32),
        grid_spec=pltpu.PrefetchScalarGridSpec(
            num_scalar_prefetch=0,
            grid=grid,
            in_specs=[
                pl.BlockSpec((input_size, tile), bmap),       # x tile  [in, Bt]
                pl.BlockSpec((hidden, input_size), full),     # W01 (folded)
                pl.BlockSpec((hidden, 1), full),              # b01
                pl.BlockSpec((hidden, hidden), full),         # W2
                pl.BlockSpec((hidden, 1), full),              # b2
                pl.BlockSpec((hidden, 1), full),              # W3 as column
                pl.BlockSpec(memory_space=pltpu.MemorySpace.SMEM),  # b3 scalar
            ],
            out_specs=pl.BlockSpec((1, tile), bmap),          # [1, Bt] lane-dense
        ),
        compiler_params=pltpu.CompilerParams(
            dimension_semantics=("parallel",) if grid[0] > 1 else ("arbitrary",)),
        cost_estimate=cost,
    )(xt, w01, b01, w2, b2, w3t, b3s)

    return out_t[:, :B].T              # [B, 1]   (slice off padded lanes, fused)


# ----------------------------- parameter init -------------------------------
def init_linear(key, fan_in, fan_out):
    """PyTorch-layout Linear init: W [out, in], b [out, 1], uniform(+-1/sqrt(fan_in))."""
    kw, kb = jax.random.split(key)
    bound = 1.0 / math.sqrt(fan_in)
    w = jax.random.uniform(kw, (fan_out, fan_in), jnp.float32, -bound, bound)
    b = jax.random.uniform(kb, (fan_out, 1), jnp.float32, -bound, bound)
    return w, b


def reference_forward(x, params):
    """Pure-JAX f32 reference matching the PyTorch Sequential exactly."""
    (w0, b0), (w1, b1), (w2, b2), (w3, b3) = params
    h = x @ w0.T + b0.T                         # Linear0, no activation
    h = jnp.maximum(h @ w1.T + b1.T, 0.0)       # Linear1 + ReLU
    h = jnp.maximum(h @ w2.T + b2.T, 0.0)       # Linear2 + ReLU
    return h @ w3.T + b3.T                      # head


# ---------------------------------- main -------------------------------------
if __name__ == "__main__":
    # StackingEnsemble(models=[m0..m3], input_size=4, n_hidden_layers=2,
    # hidden_size=32, activation_function=ReLU).  input_size == number of weak
    # models (the stacked per-sample predictions).
    B = 64
    input_size = 4
    hidden_size = 32

    key = jax.random.PRNGKey(0)
    kx, k0, k1, k2, k3 = jax.random.split(key, 5)

    # x plays the role of construct_prediction_input(...) output: [B, n_models].
    # TODO(synk): the weak models themselves (self.models) are arbitrary external
    # estimators queried on the host; only the meta-learner MLP is kernelized.
    x = jax.random.normal(kx, (B, input_size), jnp.float32)

    params = [
        init_linear(k0, input_size, hidden_size),
        init_linear(k1, hidden_size, hidden_size),
        init_linear(k2, hidden_size, hidden_size),
        init_linear(k3, hidden_size, 1),
    ]

    out = stacking_ensemble_forward(x, params)
    out = jax.block_until_ready(out)

    ref = reference_forward(x, params)
    assert out.shape == (B, 1)
    max_err = float(jnp.max(jnp.abs(out - ref)))
    assert jnp.allclose(out, ref, atol=1e-2, rtol=1e-2), \
        f"mismatch vs reference (max abs err {max_err})"

    print("KERNEL_OK")
</pallas_src>

<mosaic_0001>
module attributes {stable_mosaic.version = 11 : i64} {
  func.func @mlp_kernel(%arg0: i32, %arg1: memref<4x128xf32, #tpu.memory_space<vmem>>, %arg2: memref<32x4xf32, #tpu.memory_space<vmem>>, %arg3: memref<32x1xf32, #tpu.memory_space<vmem>>, %arg4: memref<32x32xf32, #tpu.memory_space<vmem>>, %arg5: memref<32x1xf32, #tpu.memory_space<vmem>>, %arg6: memref<32x1xf32, #tpu.memory_space<vmem>>, %arg7: memref<1xf32, #tpu.memory_space<smem>>, %arg8: memref<1x128xf32, #tpu.memory_space<vmem>>) attributes {dimension_semantics = [#tpu.dimension_semantics<arbitrary>], iteration_bounds = array<i64: 1>, scalar_prefetch = 0 : i64, scratch_operands = 0 : i64, tpu.core_type = #tpu.core_type<tc>, window_params = [{transform_indices = @transform_0, window_bounds = array<i64: 4, 128>}, {pipeline_mode = #tpu.pipeline_mode<synchronous>, transform_indices = @transform_1, window_bounds = array<i64: 32, 4>}, {pipeline_mode = #tpu.pipeline_mode<synchronous>, transform_indices = @transform_2, window_bounds = array<i64: 32, 1>}, {pipeline_mode = #tpu.pipeline_mode<synchronous>, transform_indices = @transform_3, window_bounds = array<i64: 32, 32>}, {pipeline_mode = #tpu.pipeline_mode<synchronous>, transform_indices = @transform_4, window_bounds = array<i64: 32, 1>}, {pipeline_mode = #tpu.pipeline_mode<synchronous>, transform_indices = @transform_5, window_bounds = array<i64: 32, 1>}, {transform_indices = @transform_6, window_bounds = array<i64: 1>}, {transform_indices = @transform_7, window_bounds = array<i64: 1, 128>}]} {
    %c0 = arith.constant 0 : index
    %c0_0 = arith.constant 0 : index
    %0 = vector.load %arg2[%c0, %c0_0] : memref<32x4xf32, #tpu.memory_space<vmem>>, vector<32x4xf32>
    %c0_1 = arith.constant 0 : index
    %c0_2 = arith.constant 0 : index
    %1 = vector.load %arg1[%c0_1, %c0_2] : memref<4x128xf32, #tpu.memory_space<vmem>>, vector<4x128xf32>
    %cst = arith.constant dense<0.000000e+00> : vector<32x128xf32>
    %2 = tpu.matmul %0, %1, %cst {dimension_numbers = #tpu.dot_dimension_numbers<[1], [0], [0], [1], [0, 0, 1, 1], [], []>} : vector<32x4xf32>, vector<4x128xf32>, vector<32x128xf32> -> vector<32x128xf32>
    %c0_3 = arith.constant 0 : index
    %c0_4 = arith.constant 0 : index
    %3 = vector.load %arg3[%c0_3, %c0_4] : memref<32x1xf32, #tpu.memory_space<vmem>>, vector<32x1xf32>
    %4 = vector.broadcast %3 : vector<32x1xf32> to vector<32x128xf32>
    %5 = arith.addf %2, %4 : vector<32x128xf32>
    %cst_5 = arith.constant 0.000000e+00 : f32
    %6 = vector.broadcast %cst_5 : f32 to vector<32x128xf32>
    %7 = arith.maximumf %5, %6 : vector<32x128xf32>
    %c0_6 = arith.constant 0 : index
    %c0_7 = arith.constant 0 : index
    %8 = vector.load %arg4[%c0_6, %c0_7] : memref<32x32xf32, #tpu.memory_space<vmem>>, vector<32x32xf32>
    %cst_8 = arith.constant dense<0.000000e+00> : vector<32x128xf32>
    %9 = tpu.matmul %8, %7, %cst_8 {dimension_numbers = #tpu.dot_dimension_numbers<[1], [0], [0], [1], [0, 0, 1, 1], [], []>} : vector<32x32xf32>, vector<32x128xf32>, vector<32x128xf32> -> vector<32x128xf32>
    %c0_9 = arith.constant 0 : index
    %c0_10 = arith.constant 0 : index
    %10 = vector.load %arg5[%c0_9, %c0_10] : memref<32x1xf32, #tpu.memory_space<vmem>>, vector<32x1xf32>
    %11 = vector.broadcast %10 : vector<32x1xf32> to vector<32x128xf32>
    %12 = arith.addf %9, %11 : vector<32x128xf32>
    %cst_11 = arith.constant 0.000000e+00 : f32
    %13 = vector.broadcast %cst_11 : f32 to vector<32x128xf32>
    %14 = arith.maximumf %12, %13 : vector<32x128xf32>
    %c0_12 = arith.constant 0 : index
    %c0_13 = arith.constant 0 : index
    %15 = vector.load %arg6[%c0_12, %c0_13] : memref<32x1xf32, #tpu.memory_space<vmem>>, vector<32x1xf32>
    %16 = vector.broadcast %15 : vector<32x1xf32> to vector<32x128xf32>
    %17 = arith.mulf %16, %14 : vector<32x128xf32>
    %cst_14 = arith.constant dense<0.000000e+00> : vector<128xf32>
    %18 = vector.multi_reduction <add>, %17, %cst_14 [0] : vector<32x128xf32> to vector<128xf32>
    %19 = vector.shape_cast %18 : vector<128xf32> to vector<1x128xf32>
    %c0_15 = arith.constant 0 : index
    %20 = memref.load %arg7[%c0_15] : memref<1xf32, #tpu.memory_space<smem>>
    %21 = vector.broadcast %20 : f32 to vector<1x128xf32>
    %22 = arith.addf %19, %21 : vector<1x128xf32>
    %c0_16 = arith.constant 0 : index
    %c0_17 = arith.constant 0 : index
    %23 = vector.load %arg8[%c0_16, %c0_17] : memref<1x128xf32, #tpu.memory_space<vmem>>, vector<1x128xf32>
    tpu.vector_store %arg8[%c0_16, %c0_17], %22 {strides = array<i32>} : memref<1x128xf32, #tpu.memory_space<vmem>>, vector<1x128xf32>,
    return
  }
  func.func @transform_0(%arg0: i32) -> (i32, i32) {
    %c0_i32 = arith.constant 0 : i32
    %c0_i32_0 = arith.constant 0 : i32
    return %c0_i32, %arg0 : i32, i32
  }
  func.func @transform_1(%arg0: i32) -> (i32, i32) {
    %c0_i32 = arith.constant 0 : i32
    %c0_i32_0 = arith.constant 0 : i32
    %c0_i32_1 = arith.constant 0 : i32
    return %c0_i32, %c0_i32_0 : i32, i32
  }
  func.func @transform_2(%arg0: i32) -> (i32, i32) {
    %c0_i32 = arith.constant 0 : i32
    %c0_i32_0 = arith.constant 0 : i32
    %c0_i32_1 = arith.constant 0 : i32
    return %c0_i32, %c0_i32_0 : i32, i32
  }
  func.func @transform_3(%arg0: i32) -> (i32, i32) {
    %c0_i32 = arith.constant 0 : i32
    %c0_i32_0 = arith.constant 0 : i32
    %c0_i32_1 = arith.constant 0 : i32
    return %c0_i32, %c0_i32_0 : i32, i32
  }
  func.func @transform_4(%arg0: i32) -> (i32, i32) {
    %c0_i32 = arith.constant 0 : i32
    %c0_i32_0 = arith.constant 0 : i32
    %c0_i32_1 = arith.constant 0 : i32
    return %c0_i32, %c0_i32_0 : i32, i32
  }
  func.func @transform_5(%arg0: i32) -> (i32, i32) {
    %c0_i32 = arith.constant 0 : i32
    %c0_i32_0 = arith.constant 0 : i32
    %c0_i32_1 = arith.constant 0 : i32
    return %c0_i32, %c0_i32_0 : i32, i32
  }
  func.func @transform_6(%arg0: i32) -> i32 {
    %c0_i32 = arith.constant 0 : i32
    %c0_i32_0 = arith.constant 0 : i32
    return %c0_i32 : i32
  }
  func.func @transform_7(%arg0: i32) -> (i32, i32) {
    %c0_i32 = arith.constant 0 : i32
    %c0_i32_0 = arith.constant 0 : i32
    return %c0_i32, %arg0 : i32, i32
  }
}

</mosaic_0001>

<llo_original>
// kernel: stacking_ensemble_forward.1
$region0: #{stacking_ensemble_forward.1}
  #allocation0 [shape = 'u32[]', space=smem, size = 0x4, offset = 0x4, fixed_abs, tag = 'smem constant byte address 0x4 - core index']
  #allocation1 [shape = 'u32[144,128]{1,0:T(1,128)}', space=vmem, size = 0x12000, scoped, tag = 'internal scratch']
  #allocation2 [shape = 'f32[1]{0:T(128)S(6)}', space=smem, size = 0x200, scoped, tag = 'scoped memory for stacking_ensemble_forward.1']
  %s0 = inlined_call_operand.vmem [shape: f32[4,128], index: 0, kind: input, shape index: {}]
  %s1 = inlined_call_operand.vmem [shape: f32[32,4], index: 1, kind: input, shape index: {}]
  %s2 = inlined_call_operand.vmem [shape: f32[32,1], index: 2, kind: input, shape index: {}]
  %s3 = inlined_call_operand.vmem [shape: f32[32,32], index: 3, kind: input, shape index: {}]
  %s4 = inlined_call_operand.vmem [shape: f32[32,1], index: 4, kind: input, shape index: {}]
  %s5 = inlined_call_operand.vmem [shape: f32[32,1], index: 5, kind: input, shape index: {}]
  %s6 = inlined_call_operand.<no memory space> [shape: f32[1], index: 6, kind: input, shape index: {}]
  %s7 = inlined_call_operand.vmem [shape: f32[1,128], index: 7, kind: output, shape index: {}]
  %s8 = sld [smem:[#allocation0]]
  $region38: #{stacking_ensemble_forward.1} parent=0
    _
  %s10 = ssub.s32 1, %s8
  %s11 = scalar_select 0, %s10, %s8
  %12 = sst [smem:[#allocation2]] %s6
  // Predicated region
  $region2: #{stacking_ensemble_forward.1} parent=0 // pred_check
    _
  $region3: #{stacking_ensemble_forward.1} parent=0 // pred_check_branch
    %14 = sbr.rel (0) target = $region5
  $region4: #{stacking_ensemble_forward.1} parent=0 // pred_region
    _
  $region5: #{stacking_ensemble_forward.1} parent=0 // pred_fallthru
    _
  // Predicated region
  $region6: #{stacking_ensemble_forward.1} parent=0 // pred_check
    _
  $region7: #{stacking_ensemble_forward.1} parent=0 // pred_check_branch
    %16 = sbr.rel (0) target = $region9
  $region8: #{stacking_ensemble_forward.1} parent=0 // pred_region
    _
  $region9: #{stacking_ensemble_forward.1} parent=0 // pred_fallthru
    _
  // Predicated region
  $region10: #{stacking_ensemble_forward.1} parent=0 // pred_check
    _
  $region11: #{stacking_ensemble_forward.1} parent=0 // pred_check_branch
    %18 = sbr.rel (0) target = $region13
  $region12: #{stacking_ensemble_forward.1} parent=0 // pred_region
    _
  $region13: #{stacking_ensemble_forward.1} parent=0 // pred_fallthru
    _
  // Predicated region
  $region14: #{stacking_ensemble_forward.1} parent=0 // pred_check
    _
  $region15: #{stacking_ensemble_forward.1} parent=0 // pred_check_branch
    %20 = sbr.rel (0) target = $region17
  $region16: #{stacking_ensemble_forward.1} parent=0 // pred_region
    _
  $region17: #{stacking_ensemble_forward.1} parent=0 // pred_fallthru
    _
  // Predicated region
  $region18: #{stacking_ensemble_forward.1} parent=0 // pred_check
    _
  $region19: #{stacking_ensemble_forward.1} parent=0 // pred_check_branch
    %22 = sbr.rel (0) target = $region21
  $region20: #{stacking_ensemble_forward.1} parent=0 // pred_region
    _
  $region21: #{stacking_ensemble_forward.1} parent=0 // pred_fallthru
    _
  // Predicated region
  $region22: #{stacking_ensemble_forward.1} parent=0 // pred_check
    _
  $region23: #{stacking_ensemble_forward.1} parent=0 // pred_check_branch
    %24 = sbr.rel (0) target = $region25
  $region24: #{stacking_ensemble_forward.1} parent=0 // pred_region
    _
  $region25: #{stacking_ensemble_forward.1} parent=0 // pred_fallthru
    _
  // Predicated region
  $region26: #{stacking_ensemble_forward.1} parent=0 // pred_check
    _
  $region27: #{stacking_ensemble_forward.1} parent=0 // pred_check_branch
    %26 = sbr.rel (0) target = $region29
  $region28: #{stacking_ensemble_forward.1} parent=0 // pred_region
    _
  $region29: #{stacking_ensemble_forward.1} parent=0 // pred_fallthru
    _
  %v27 = vld [vmem:[%s1] sm:$0xff]
  %v28 = vld [vmem:[%s1 + $0x8] sm:$0xff]
  %v29 = vld [vmem:[%s1 + $0x10] sm:$0xff]
  %v30 = vld [vmem:[%s1 + $0x18] sm:$0xff]
  %v31 = vld [vmem:[%s0] sm:$0xf]
  %v32 = vld [vmem:[%s2] sm:$0xff]
  %v33 = vld [vmem:[%s2 + $0x8] sm:$0xff]
  %v34 = vld [vmem:[%s2 + $0x10] sm:$0xff]
  %v35 = vld [vmem:[%s2 + $0x18] sm:$0xff]
  %37 = vset.pattern.permute.xlu0 0
  %38 = vperm.xlu0 %37, %v32
  %v39 = vpop.permute.xlu0 %38
  %42 = vset.pattern.permute.xlu0 0
  %43 = vperm.xlu0 %42, %v33
  %v44 = vpop.permute.xlu0 %43
  %47 = vset.pattern.permute.xlu0 0
  %48 = vperm.xlu0 %47, %v34
  %v49 = vpop.permute.xlu0 %48
  %52 = vset.pattern.permute.xlu0 0
  %53 = vperm.xlu0 %52, %v35
  %v54 = vpop.permute.xlu0 %53
  %vm56 = vcmask 31744
  %v58 = vsel %vm56, %v27, 0
  %v61 = vsel %vm56, %v28, 0
  %v64 = vsel %vm56, %v29, 0
  %v67 = vsel %vm56, %v30, 0
  %vm69 = vcmask 1043456
  %v71 = vsel %vm69, %v31, 0
  %73 = vmatprep.subr.mxu0 0.0
  %74 = vmatpush1.msra.mxu0 %v71
  %75 = vmatprep.subr.mxu0 0.0
  %76 = vmatpush1.msra.mxu0 0.0
  %77 = vmatprep.subr.mxu0 0.0
  %78 = vmatpush1.msra.mxu0 0.0
  %79 = vmatprep.subr.mxu0 0.0
  %80 = vmatpush1.msra.mxu0 0.0
  %81 = vmatprep.subr.mxu0 0.0
  %82 = vmatpush1.msra.mxu0 0.0
  %83 = vmatprep.subr.mxu0 0.0
  %84 = vmatpush1.msra.mxu0 0.0
  %85 = vmatprep.subr.mxu0 0.0
  %86 = vmatpush1.msra.mxu0 0.0
  %87 = vmatprep.subr.mxu0 0.0
  %88 = vmatpush1.msra.mxu0 0.0
  %89 = vmatprep.subr.mxu0 0.0
  %90 = vmatpush1.msra.mxu0 0.0
  %91 = vmatprep.subr.mxu0 0.0
  %92 = vmatpush1.msra.mxu0 0.0
  %93 = vmatprep.subr.mxu0 0.0
  %94 = vmatpush1.msra.mxu0 0.0
  %95 = vmatprep.subr.mxu0 0.0
  %96 = vmatpush1.msra.mxu0 0.0
  %97 = vmatprep.subr.mxu0 0.0
  %98 = vmatpush1.msra.mxu0 0.0
  %99 = vmatprep.subr.mxu0 0.0
  %100 = vmatpush1.msra.mxu0 0.0
  %101 = vmatprep.subr.mxu0 0.0
  %102 = vmatpush1.msra.mxu0 0.0
  %103 = vmatprep.subr.mxu0 0.0
  %104 = vmatpush1.msra.mxu0 0.0
  %105 = vmatprep.subr.mxu0 0.0
  %106 = vmatpush1.msra.mxu0 0.0
  %107 = vmatprep.subr.mxu0 0.0
  %108 = vmatpush1.msra.mxu0 0.0
  %109 = vmatprep.subr.mxu0 0.0
  %110 = vmatpush1.msra.mxu0 0.0
  %111 = vmatprep.subr.mxu0 0.0
  %112 = vmatpush1.msra.mxu0 0.0
  %113 = vmatprep.subr.mxu0 0.0
  %114 = vmatpush1.msra.mxu0 0.0
  %115 = vmatprep.subr.mxu0 0.0
  %116 = vmatpush1.msra.mxu0 0.0
  %117 = vmatprep.subr.mxu0 0.0
  %118 = vmatpush1.msra.mxu0 0.0
  %119 = vmatprep.subr.mxu0 0.0
  %120 = vmatpush1.msra.mxu0 0.0
  %121 = vmatprep.subr.mxu0 0.0
  %122 = vmatpush1.msra.mxu0 0.0
  %123 = vmatprep.subr.mxu0 0.0
  %124 = vmatpush1.msra.mxu0 0.0
  %125 = vmatprep.subr.mxu0 0.0
  %126 = vmatpush1.msra.mxu0 0.0
  %127 = vmatprep.subr.mxu0 0.0
  %128 = vmatpush1.msra.mxu0 0.0
  %129 = vmatprep.subr.mxu0 0.0
  %130 = vmatpush1.msra.mxu0 0.0
  %131 = vmatprep.subr.mxu0 0.0
  %132 = vmatpush1.msra.mxu0 0.0
  %133 = vmatprep.subr.mxu0 0.0
  %134 = vmatpush1.msra.mxu0 0.0
  %135 = vmatprep.subr.mxu0 0.0
  %136 = vmatpush1.msra.mxu0 0.0
  %137 = vmatprep.mubr.f32.mxu0 0.0
  %138 = vmatmul.mubr.f32.gmra.mrb[0].mxu0 %v58
  %v139 = vpop.f32.mrb[0].mxu0
  %v140 = vadd.f32 %v39, %v139
  %v141 = vpop.f32.mrb[0].mxu0
  %142 = vmatprep.mubr.f32.mxu0 0.0
  %143 = vmatmul.mubr.f32.gmra.mrb[0].mxu0 %v61
  %v144 = vpop.f32.mrb[0].mxu0
  %v145 = vadd.f32 %v44, %v144
  %v146 = vpop.f32.mrb[0].mxu0
  %147 = vmatprep.mubr.f32.mxu0 0.0
  %148 = vmatmul.mubr.f32.gmra.mrb[0].mxu0 %v64
  %v149 = vpop.f32.mrb[0].mxu0
  %v150 = vadd.f32 %v49, %v149
  %v151 = vpop.f32.mrb[0].mxu0
  %152 = vmatprep.mubr.f32.mxu0 0.0
  %153 = vmatmul.mubr.f32.gmra.mrb[0].mxu0 %v67
  %v154 = vpop.f32.mrb[0].mxu0
  %v155 = vadd.f32 %v54, %v154
  %v156 = vpop.f32.mrb[0].mxu0
  %157 = vdwg.mxu0
  %v158 = vmax.f32 %v140, 0.0
  %v159 = vmax.f32 %v145, 0.0
  %v160 = vmax.f32 %v150, 0.0
  %v161 = vmax.f32 %v155, 0.0
  %v162 = vld [vmem:[%s3] sm:$0xff]
  %v163 = vld [vmem:[%s3 + $0x8] sm:$0xff]
  %v164 = vld [vmem:[%s3 + $0x10] sm:$0xff]
  %v165 = vld [vmem:[%s3 + $0x18] sm:$0xff]
  %v166 = vld [vmem:[%s4] sm:$0xff]
  %v167 = vld [vmem:[%s4 + $0x8] sm:$0xff]
  %v168 = vld [vmem:[%s4 + $0x10] sm:$0xff]
  %v169 = vld [vmem:[%s4 + $0x18] sm:$0xff]
  %171 = vset.pattern.permute.xlu0 0
  %172 = vperm.xlu0 %171, %v166
  %v173 = vpop.permute.xlu0 %172
  %176 = vset.pattern.permute.xlu0 0
  %177 = vperm.xlu0 %176, %v167
  %v178 = vpop.permute.xlu0 %177
  %181 = vset.pattern.permute.xlu0 0
  %182 = vperm.xlu0 %181, %v168
  %v183 = vpop.permute.xlu0 %182
  %186 = vset.pattern.permute.xlu0 0
  %187 = vperm.xlu0 %186, %v169
  %v188 = vpop.permute.xlu0 %187
  %vm190 = vcmask 261120
  %v192 = vsel %vm190, %v162, 0
  %v195 = vsel %vm190, %v163, 0
  %v198 = vsel %vm190, %v164, 0
  %v201 = vsel %vm190, %v165, 0
  %203 = vmatprep.subr.mxu0 0.0
  %204 = vmatpush1.msra.mxu0 %v158
  %205 = vmatprep.subr.mxu0 0.0
  %206 = vmatpush1.msra.mxu0 %v159
  %207 = vmatprep.subr.mxu0 0.0
  %208 = vmatpush1.msra.mxu0 %v160
  %209 = vmatprep.subr.mxu0 0.0
  %210 = vmatpush1.msra.mxu0 %v161
  %211 = vmatprep.subr.mxu0 0.0
  %212 = vmatpush1.msra.mxu0 0.0
  %213 = vmatprep.subr.mxu0 0.0
  %214 = vmatpush1.msra.mxu0 0.0
  %215 = vmatprep.subr.mxu0 0.0
  %216 = vmatpush1.msra.mxu0 0.0
  %217 = vmatprep.subr.mxu0 0.0
  %218 = vmatpush1.msra.mxu0 0.0
  %219 = vmatprep.subr.mxu0 0.0
  %220 = vmatpush1.msra.mxu0 0.0
  %221 = vmatprep.subr.mxu0 0.0
  %222 = vmatpush1.msra.mxu0 0.0
  %223 = vmatprep.subr.mxu0 0.0
  %224 = vmatpush1.msra.mxu0 0.0
  %225 = vmatprep.subr.mxu0 0.0
  %226 = vmatpush1.msra.mxu0 0.0
  %227 = vmatprep.subr.mxu0 0.0
  %228 = vmatpush1.msra.mxu0 0.0
  %229 = vmatprep.subr.mxu0 0.0
  %230 = vmatpush1.msra.mxu0 0.0
  %231 = vmatprep.subr.mxu0 0.0
  %232 = vmatpush1.msra.mxu0 0.0
  %233 = vmatprep.subr.mxu0 0.0
  %234 = vmatpush1.msra.mxu0 0.0
  %235 = vmatprep.subr.mxu0 0.0
  %236 = vmatpush1.msra.mxu0 0.0
  %237 = vmatprep.subr.mxu0 0.0
  %238 = vmatpush1.msra.mxu0 0.0
  %239 = vmatprep.subr.mxu0 0.0
  %240 = vmatpush1.msra.mxu0 0.0
  %241 = vmatprep.subr.mxu0 0.0
  %242 = vmatpush1.msra.mxu0 0.0
  %243 = vmatprep.subr.mxu0 0.0
  %244 = vmatpush1.msra.mxu0 0.0
  %245 = vmatprep.subr.mxu0 0.0
  %246 = vmatpush1.msra.mxu0 0.0
  %247 = vmatprep.subr.mxu0 0.0
  %248 = vmatpush1.msra.mxu0 0.0
  %249 = vmatprep.subr.mxu0 0.0
  %250 = vmatpush1.msra.mxu0 0.0
  %251 = vmatprep.subr.mxu0 0.0
  %252 = vmatpush1.msra.mxu0 0.0
  %253 = vmatprep.subr.mxu0 0.0
  %254 = vmatpush1.msra.mxu0 0.0
  %255 = vmatprep.subr.mxu0 0.0
  %256 = vmatpush1.msra.mxu0 0.0
  %257 = vmatprep.subr.mxu0 0.0
  %258 = vmatpush1.msra.mxu0 0.0
  %259 = vmatprep.subr.mxu0 0.0
  %260 = vmatpush1.msra.mxu0 0.0
  %261 = vmatprep.subr.mxu0 0.0
  %262 = vmatpush1.msra.mxu0 0.0
  %263 = vmatprep.subr.mxu0 0.0
  %264 = vmatpush1.msra.mxu0 0.0
  %265 = vmatprep.subr.mxu0 0.0
  %266 = vmatpush1.msra.mxu0 0.0
  %267 = vmatprep.mubr.f32.mxu0 0.0
  %268 = vmatmul.mubr.f32.gmra.mrb[0].mxu0 %v192
  %v269 = vpop.f32.mrb[0].mxu0
  %v270 = vadd.f32 %v173, %v269
  %v271 = vpop.f32.mrb[0].mxu0
  %272 = vmatprep.mubr.f32.mxu0 0.0
  %273 = vmatmul.mubr.f32.gmra.mrb[0].mxu0 %v195
  %v274 = vpop.f32.mrb[0].mxu0
  %v275 = vadd.f32 %v178, %v274
  %v276 = vpop.f32.mrb[0].mxu0
  %277 = vmatprep.mubr.f32.mxu0 0.0
  %278 = vmatmul.mubr.f32.gmra.mrb[0].mxu0 %v198
  %v279 = vpop.f32.mrb[0].mxu0
  %v280 = vadd.f32 %v183, %v279
  %v281 = vpop.f32.mrb[0].mxu0
  %282 = vmatprep.mubr.f32.mxu0 0.0
  %283 = vmatmul.mubr.f32.gmra.mrb[0].mxu0 %v201
  %v284 = vpop.f32.mrb[0].mxu0
  %v285 = vadd.f32 %v188, %v284
  %v286 = vpop.f32.mrb[0].mxu0
  %287 = vdwg.mxu0
  %v288 = vmax.f32 %v270, 0.0
  %v289 = vmax.f32 %v275, 0.0
  %v290 = vmax.f32 %v280, 0.0
  %v291 = vmax.f32 %v285, 0.0
  %v292 = vld [vmem:[%s5] sm:$0xff]
  %v293 = vld [vmem:[%s5 + $0x8] sm:$0xff]
  %v294 = vld [vmem:[%s5 + $0x10] sm:$0xff]
  %v295 = vld [vmem:[%s5 + $0x18] sm:$0xff]
  %297 = vset.pattern.permute.xlu0 0
  %298 = vperm.xlu0 %297, %v292
  %v299 = vpop.permute.xlu0 %298
  %302 = vset.pattern.permute.xlu0 0
  %303 = vperm.xlu0 %302, %v293
  %v304 = vpop.permute.xlu0 %303
  %307 = vset.pattern.permute.xlu0 0
  %308 = vperm.xlu0 %307, %v294
  %v309 = vpop.permute.xlu0 %308
  %312 = vset.pattern.permute.xlu0 0
  %313 = vperm.xlu0 %312, %v295
  %v314 = vpop.permute.xlu0 %313
  %v316 = vmul.f32 %v299, %v288
  %v317 = vmul.f32 %v304, %v289
  %v318 = vmul.f32 %v309, %v290
  %v319 = vmul.f32 %v314, %v291
  %v320 = vadd.f32 %v316, %v317
  %v321 = vadd.f32 %v320, %v318
  %v322 = vadd.f32 %v321, %v319
  %v323 = vrot.slane %v322, 4
  %v324 = vadd.f32 %v322, %v323
  %v325 = vrot.slane %v324, 2
  %v326 = vadd.f32 %v324, %v325
  %v327 = vrot.slane %v326, 1
  %v328 = vadd.f32 %v326, %v327
  %s329 = sld [smem:[#allocation2]]
  %v330 = vstv %s329
  %v331 = vadd.f32 %v328, %v330
  %332 = vst [vmem:[%s7] sm:$0x1] %v331
  // Predicated region
  $region30: #{stacking_ensemble_forward.1} parent=0 // pred_check
    _
  $region31: #{stacking_ensemble_forward.1} parent=0 // pred_check_branch
    %334 = sbr.rel (0) target = $region33
  $region32: #{stacking_ensemble_forward.1} parent=0 // pred_region
    _
  $region33: #{stacking_ensemble_forward.1} parent=0 // pred_fallthru
    _
  // Predicated region
  $region34: #{stacking_ensemble_forward.1} parent=0 // pred_check
    _
  $region35: #{stacking_ensemble_forward.1} parent=0 // pred_check_branch
    %336 = sbr.rel (0) target = $region37
  $region36: #{stacking_ensemble_forward.1} parent=0 // pred_region
    _
  $region37: #{stacking_ensemble_forward.1} parent=0 // pred_fallthru
    _

</llo_original>
